<compile_context>
chip_gen: v5e
topology: v5e:2x2
jax: 0.10.0
libtpu: 0.0.40
codegen_flags: <defaults>
</compile_context>

<pallas_src>
import functools

import jax
import jax.numpy as jnp
import numpy as np
from jax.experimental import pallas as pl
from jax.experimental.pallas import tpu as pltpu


def _round_up(v, m):
    return (v + m - 1) // m * m


# ---------------------------------------------------------------------------
# Fused kernel: one batch element per grid step.
#   mask_ref : (3, HW_p)            row0: 0 where w==0, row1: 0 where w==W-1,
#                                   row2: 1 on valid (non-padded) lanes
#   x_ref    : (1, Cin, HW_p)       NCHW input, spatial flattened + lane pad
#   w1_ref   : (Cmid_p, 9*Cin_p)    3x3 conv weights, taps folded (im2col)
#   b1_ref   : (Cmid_p, 1)
#   wt_ref   : (4*Cout_p, 9*Cmid_p) stacked sub-pixel (phase) weights
#   bt_ref   : (4*Cout_p, 1)
#   o_ref    : (1, 2, 2, Cout_p, HW_p) per-parity output (lane-dense)
#   scratch  : xbig (Cin_p, HW_p+2M), ybig (Cmid_p, HW_p+2M), p (rows, HW_p)
# ---------------------------------------------------------------------------
def _decoder_block_kernel(mask_ref, x_ref, w1_ref, b1_ref, wt_ref, bt_ref,
                          o_ref, xbig_ref, ybig_ref, p_ref,
                          *, W, HW, HW_p, Cin, Cin_p, Cmid_p, Cout_p, M,
                          mm_dtype):
    f32 = jnp.float32

    # -- zero only the halo margins (+ padded input-channel rows) ------------
    # The data region [:, M:M+HW_p] is fully rewritten below every step, so no
    # full-buffer zero fill is needed.
    xbig_ref[:, 0:M] = jnp.zeros((Cin_p, M), mm_dtype)
    xbig_ref[:, M + HW_p:M + HW_p + M] = jnp.zeros((Cin_p, M), mm_dtype)
    ybig_ref[:, 0:M] = jnp.zeros((Cmid_p, M), mm_dtype)
    ybig_ref[:, M + HW_p:M + HW_p + M] = jnp.zeros((Cmid_p, M), mm_dtype)
    if Cin_p > Cin:
        xbig_ref[Cin:Cin_p, M:M + HW_p] = jnp.zeros((Cin_p - Cin, HW_p),
                                                    mm_dtype)

    # -- place x into the padded staging buffer (single cast to mm_dtype) ----
    xbig_ref[0:Cin, M:M + HW_p] = x_ref[0].astype(mm_dtype)

    mask_l = mask_ref[0:1, :]   # kills dw = -1 taps that wrapped a row
    mask_r = mask_ref[1:2, :]   # kills dw = +1 taps that wrapped a row

    def build_patch(src_ref, crows):
        # Shared 9-shift (3x3) im2col patch matrix; stores are tile aligned
        # (crows is a multiple of the packed sublane tile, HW_p of 128 lanes).
        t = 0
        for dh in (-1, 0, 1):
            for dw in (-1, 0, 1):
                shift = dh * W + dw
                sl = src_ref[:, M + shift:M + shift + HW_p]   # (crows, HW_p)
                if dw == -1:
                    sl = sl * mask_l
                elif dw == 1:
                    sl = sl * mask_r
                p_ref[t * crows:(t + 1) * crows, :] = sl
                t += 1

    # ---- stage 1: 3x3 conv (pad=1) + bias + ReLU, one im2col MXU dot -------
    build_patch(xbig_ref, Cin_p)
    y = jnp.dot(w1_ref[...], p_ref[0:9 * Cin_p, :],
                preferred_element_type=f32)                    # (Cmid_p, HW_p)
    y = jnp.maximum(y + b1_ref[...], 0.0)
    if HW_p != HW:
        y = y * mask_ref[2:3, :]     # zero the dead padded lanes (bias leak)
    ybig_ref[:, M:M + HW_p] = y.astype(mm_dtype)   # stays in VMEM, never HBM

    # ---- stage 2: ConvTranspose2d(4, s=2, p=1) + bias + ReLU ----------------
    # All 4 output parities (a, b) share the same 9-shift patch of y; phases
    # are stacked on the result-row axis -> one MXU dot.
    build_patch(ybig_ref, Cmid_p)
    zs = jnp.dot(wt_ref[...], p_ref[0:9 * Cmid_p, :],
                 preferred_element_type=f32)                  # (4*Cout_p, HW_p)
    zs = jnp.maximum(zs + bt_ref[...], 0.0)
    for a in range(2):
        for b in range(2):
            ph = 2 * a + b
            o_ref[0, a, b] = zs[ph * Cout_p:(ph + 1) * Cout_p, :].astype(
                o_ref.dtype)


# ---------------------------------------------------------------------------
# DecoderBlockV2 forward (is_deconv=True)
# ---------------------------------------------------------------------------
def decoder_block_v2(x_nchw, w1, b1, wt, bt, matmul_dtype=jnp.bfloat16):
    """
    x_nchw : (N, Cin, H, W)     float32
    w1     : (Cmid, Cin, 3, 3)  Conv2d weight (PyTorch layout)
    b1     : (Cmid,)            Conv2d bias
    wt     : (Cmid, Cout, 4, 4) ConvTranspose2d weight (PyTorch layout)
    bt     : (Cout,)            ConvTranspose2d bias
    returns: (N, Cout, 2H, 2W)  float32 (NCHW)

    matmul_dtype: dtype fed to the MXU (accumulation is always f32).  bfloat16
    (default) is MXU-native on v5e/v6e/v7x and halves staging VMEM / copy
    bandwidth; pass jnp.float32 for bit-accurate verification.
    # TODO(synk): optional fp8 weights-only path on v7x.
    """
    N, Cin, H, W = x_nchw.shape
    Cmid = w1.shape[0]
    Cout = wt.shape[1]
    HW = H * W
    f32 = jnp.float32

    sub = 8 * (4 // jnp.dtype(matmul_dtype).itemsize)  # packed sublane tile
    Cin_p = _round_up(Cin, sub)
    Cmid_p = _round_up(Cmid, sub)
    Cout_p = _round_up(Cout, 8)        # dot result / output rows are f32
    HW_p = _round_up(HW, 128)          # lane-dense flattened spatial axis
    M = _round_up(W + 1, 128)          # zero halo margin, lane aligned

    x_flat = x_nchw.astype(f32).reshape(N, Cin, HW)
    if HW_p != HW:
        x_flat = jnp.pad(x_flat, ((0, 0), (0, 0), (0, HW_p - HW)))

    # Per-lane masks: rows 0/1 kill horizontally row-wrapped taps; row 2 marks
    # the valid (non-padded) lanes.
    idx = jnp.arange(HW_p, dtype=jnp.int32)
    col = idx % W
    masks = jnp.stack([col != 0, col != W - 1, idx < HW]).astype(matmul_dtype)

    # Fold the 9 taps of the 3x3 conv into one (Cmid_p, 9*Cin_p) matrix.
    w1f = w1.astype(f32)
    w1_cat = jnp.concatenate(
        [jnp.pad(w1f[:, :, kh, kw], ((0, Cmid_p - Cmid), (0, Cin_p - Cin)))
         for kh in range(3) for kw in range(3)], axis=1).astype(matmul_dtype)
    b1_p = jnp.pad(b1.astype(f32), (0, Cmid_p - Cmid)).reshape(Cmid_p, 1)

    # Stacked sub-pixel weights of ConvTranspose2d(4, 2, 1): output parity
    # (a, b) uses taps (dh, dw) with dh in {a-1, a}, dw in {b-1, b}; unused
    # taps of the shared 3x3 shift set are zero.  The kernel element is
    # [KT[a][i], KT[b][j]] with i = dh - a + 1, j = dw - b + 1.
    KT = ((3, 1), (2, 0))
    wtf = wt.astype(f32)
    phase_rows, bias_rows = [], []
    for a in range(2):
        for b in range(2):
            blocks = []
            for dh in (-1, 0, 1):
                for dw in (-1, 0, 1):
                    i, j = dh - a + 1, dw - b + 1
                    if 0 <= i <= 1 and 0 <= j <= 1:
                        blk = jnp.pad(wtf[:, :, KT[a][i], KT[b][j]].T,
                                      ((0, Cout_p - Cout), (0, Cmid_p - Cmid)))
                    else:
                        blk = jnp.zeros((Cout_p, Cmid_p), f32)
                    blocks.append(blk)
            phase_rows.append(jnp.concatenate(blocks, axis=1))
            bias_rows.append(jnp.pad(bt.astype(f32), (0, Cout_p - Cout)))
    wt_stack = jnp.concatenate(phase_rows, axis=0).astype(matmul_dtype)
    bt_stack = jnp.concatenate(bias_rows, axis=0).reshape(4 * Cout_p, 1)

    kernel = functools.partial(
        _decoder_block_kernel, W=W, HW=HW, HW_p=HW_p, Cin=Cin, Cin_p=Cin_p,
        Cmid_p=Cmid_p, Cout_p=Cout_p, M=M, mm_dtype=matmul_dtype)

    p_rows = 9 * max(Cin_p, Cmid_p)
    out = pl.pallas_call(
        kernel,
        out_shape=jax.ShapeDtypeStruct((N, 2, 2, Cout_p, HW_p), f32),
        grid=(N,),
        in_specs=[
            pl.BlockSpec((3, HW_p), lambda n: (0, 0)),                 # masks
            pl.BlockSpec((1, Cin, HW_p), lambda n: (n, 0, 0)),         # x
            pl.BlockSpec((Cmid_p, 9 * Cin_p), lambda n: (0, 0)),       # w1
            pl.BlockSpec((Cmid_p, 1), lambda n: (0, 0)),               # b1
            pl.BlockSpec((4 * Cout_p, 9 * Cmid_p), lambda n: (0, 0)),  # wt
            pl.BlockSpec((4 * Cout_p, 1), lambda n: (0, 0)),           # bt
        ],
        out_specs=pl.BlockSpec((1, 2, 2, Cout_p, HW_p),
                               lambda n: (n, 0, 0, 0, 0)),
        scratch_shapes=[
            pltpu.VMEM((Cin_p, HW_p + 2 * M), matmul_dtype),   # padded x
            pltpu.VMEM((Cmid_p, HW_p + 2 * M), matmul_dtype),  # padded y
            pltpu.VMEM((p_rows, HW_p), matmul_dtype),          # im2col patches
        ],
        compiler_params=pltpu.CompilerParams(
            dimension_semantics=("parallel",),
            # 128 MiB physical VMEM on v5e/v6e, 64 MiB on v7x; default scoped
            # limit (32 MiB) is too tight for large decoder feature maps.
            # TODO(synk): for very large HW on v7x, band-tile the spatial axis
            # (second "parallel" grid axis with a 2-row halo) so both
            # TensorCores get work even when N == 1 and the patch matrix
            # shrinks by HW/band.
            vmem_limit_bytes=64 * 1024 * 1024,
        ),
    )(masks, x_flat, w1_cat, b1_p, wt_stack, bt_stack)

    # Interleave the 4 output parities: (N,2,2,Cout_p,HW_p) -> (N,Cout,2H,2W).
    # TODO(synk): if the consumer accepts parity-major (or bf16) output, the
    # width-parity interleave can be packed in-kernel so this becomes a
    # row-granularity copy instead of a 4-byte-granularity transpose.
    out = out[:, :, :, :Cout, :HW].reshape(N, 2, 2, Cout, H, W)
    out = jnp.transpose(out, (0, 3, 4, 1, 5, 2))
    return out.reshape(N, Cout, 2 * H, 2 * W)


# ---------------------------------------------------------------------------
# Pure-numpy reference following the PyTorch formulas directly.
# ---------------------------------------------------------------------------
def _reference(x_nchw, w1, b1, wt, bt):
    x = np.transpose(np.asarray(x_nchw), (0, 2, 3, 1)).astype(np.float32)
    w1 = np.asarray(w1); b1 = np.asarray(b1)
    wt = np.asarray(wt); bt = np.asarray(bt)
    N, H, W, Cin = x.shape
    Cout = wt.shape[1]

    # Conv2d 3x3 pad=1 + ReLU
    xp = np.pad(x, ((0, 0), (1, 1), (1, 1), (0, 0)))
    y = np.zeros((N, H, W, w1.shape[0]), np.float32)
    for kh in range(3):
        for kw in range(3):
            y += xp[:, kh:kh + H, kw:kw + W, :] @ w1[:, :, kh, kw].T
    y = np.maximum(y + b1, 0.0)

    # ConvTranspose2d k=4 s=2 p=1 + ReLU (direct scatter formula)
    Ho, Wo = 2 * H, 2 * W
    z = np.zeros((N, Ho, Wo, Cout), np.float32)
    for ih in range(H):
        for kh in range(4):
            oh = 2 * ih - 1 + kh
            if oh < 0 or oh >= Ho:
                continue
            for iw in range(W):
                for kw in range(4):
                    ow = 2 * iw - 1 + kw
                    if ow < 0 or ow >= Wo:
                        continue
                    z[:, oh, ow, :] += y[:, ih, iw, :] @ wt[:, :, kh, kw]
    z = np.maximum(z + bt, 0.0)
    return np.transpose(z, (0, 3, 1, 2))


if __name__ == "__main__":
    # Small deterministic config: in=4, middle=8, out=4, batch=2, spatial=16.
    N, Cin, Cmid, Cout, H, W = 2, 4, 8, 4, 16, 16

    key = jax.random.PRNGKey(0)
    kx, k1, k2, k3, k4 = jax.random.split(key, 5)
    x = jax.random.normal(kx, (N, Cin, H, W), jnp.float32)
    w1 = jax.random.normal(k1, (Cmid, Cin, 3, 3), jnp.float32) * 0.2
    b1 = jax.random.normal(k2, (Cmid,), jnp.float32) * 0.1
    wt = jax.random.normal(k3, (Cmid, Cout, 4, 4), jnp.float32) * 0.2
    bt = jax.random.normal(k4, (Cout,), jnp.float32) * 0.1

    ref = _reference(x, w1, b1, wt, bt)

    # Exact-math check: f32 MXU path proves the fused kernel logic bit-tight.
    out_f32 = jax.jit(functools.partial(decoder_block_v2,
                                        matmul_dtype=jnp.float32))(
        x, w1, b1, wt, bt)
    out_f32 = jax.block_until_ready(out_f32)
    assert out_f32.shape == (N, Cout, 2 * H, 2 * W), out_f32.shape
    np.testing.assert_allclose(np.asarray(out_f32), ref, rtol=1e-4, atol=1e-4)

    # Default fast path: bf16 MXU inputs, f32 accumulation (looser tolerance).
    out_bf16 = jax.jit(decoder_block_v2)(x, w1, b1, wt, bt)
    out_bf16 = jax.block_until_ready(out_bf16)
    assert out_bf16.shape == (N, Cout, 2 * H, 2 * W), out_bf16.shape
    np.testing.assert_allclose(np.asarray(out_bf16), ref, rtol=5e-2, atol=1e-1)

    print("KERNEL_OK")
</pallas_src>

<mosaic_0001>
module attributes {stable_mosaic.version = 11 : i64} {
  func.func @_decoder_block_kernel(%arg0: i32, %arg1: memref<3x256xf32, #tpu.memory_space<vmem>>, %arg2: memref<1x4x256xf32, #tpu.memory_space<vmem>>, %arg3: memref<8x72xf32, #tpu.memory_space<vmem>>, %arg4: memref<8x1xf32, #tpu.memory_space<vmem>>, %arg5: memref<32x72xf32, #tpu.memory_space<vmem>>, %arg6: memref<32x1xf32, #tpu.memory_space<vmem>>, %arg7: memref<1x2x2x8x256xf32, #tpu.memory_space<vmem>>, %arg8: memref<8x512xf32, #tpu.memory_space<vmem>>, %arg9: memref<8x512xf32, #tpu.memory_space<vmem>>, %arg10: memref<72x256xf32, #tpu.memory_space<vmem>>) attributes {dimension_semantics = [#tpu.dimension_semantics<parallel>], iteration_bounds = array<i64: 2>, scalar_prefetch = 0 : i64, scratch_operands = 3 : i64, tpu.core_type = #tpu.core_type<tc>, window_params = [{pipeline_mode = #tpu.pipeline_mode<synchronous>, transform_indices = @transform_0, window_bounds = array<i64: 3, 256>}, {transform_indices = @transform_1, window_bounds = array<i64: 1, 4, 256>}, {pipeline_mode = #tpu.pipeline_mode<synchronous>, transform_indices = @transform_2, window_bounds = array<i64: 8, 72>}, {pipeline_mode = #tpu.pipeline_mode<synchronous>, transform_indices = @transform_3, window_bounds = array<i64: 8, 1>}, {pipeline_mode = #tpu.pipeline_mode<synchronous>, transform_indices = @transform_4, window_bounds = array<i64: 32, 72>}, {pipeline_mode = #tpu.pipeline_mode<synchronous>, transform_indices = @transform_5, window_bounds = array<i64: 32, 1>}, {transform_indices = @transform_6, window_bounds = array<i64: 1, 2, 2, 8, 256>}]} {
    %cst = arith.constant 0.000000e+00 : f32
    %0 = vector.broadcast %cst : f32 to vector<8x128xf32>
    %c0 = arith.constant 0 : index
    %c0_0 = arith.constant 0 : index
    %1 = vector.load %arg8[%c0, %c0_0] : memref<8x512xf32, #tpu.memory_space<vmem>>, vector<8x128xf32>
    tpu.vector_store %arg8[%c0, %c0_0], %0 {strides = array<i32>} : memref<8x512xf32, #tpu.memory_space<vmem>>, vector<8x128xf32>,
    %cst_1 = arith.constant 0.000000e+00 : f32
    %2 = vector.broadcast %cst_1 : f32 to vector<8x128xf32>
    %c0_2 = arith.constant 0 : index
    %c384 = arith.constant 384 : index
    %3 = vector.load %arg8[%c0_2, %c384] : memref<8x512xf32, #tpu.memory_space<vmem>>, vector<8x128xf32>
    tpu.vector_store %arg8[%c0_2, %c384], %2 {strides = array<i32>} : memref<8x512xf32, #tpu.memory_space<vmem>>, vector<8x128xf32>,
    %cst_3 = arith.constant 0.000000e+00 : f32
    %4 = vector.broadcast %cst_3 : f32 to vector<8x128xf32>
    %c0_4 = arith.constant 0 : index
    %c0_5 = arith.constant 0 : index
    %5 = vector.load %arg9[%c0_4, %c0_5] : memref<8x512xf32, #tpu.memory_space<vmem>>, vector<8x128xf32>
    tpu.vector_store %arg9[%c0_4, %c0_5], %4 {strides = array<i32>} : memref<8x512xf32, #tpu.memory_space<vmem>>, vector<8x128xf32>,
    %cst_6 = arith.constant 0.000000e+00 : f32
    %6 = vector.broadcast %cst_6 : f32 to vector<8x128xf32>
    %c0_7 = arith.constant 0 : index
    %c384_8 = arith.constant 384 : index
    %7 = vector.load %arg9[%c0_7, %c384_8] : memref<8x512xf32, #tpu.memory_space<vmem>>, vector<8x128xf32>
    tpu.vector_store %arg9[%c0_7, %c384_8], %6 {strides = array<i32>} : memref<8x512xf32, #tpu.memory_space<vmem>>, vector<8x128xf32>,
    %cst_9 = arith.constant 0.000000e+00 : f32
    %8 = vector.broadcast %cst_9 : f32 to vector<4x256xf32>
    %c4 = arith.constant 4 : index
    %c128 = arith.constant 128 : index
    %9 = vector.load %arg8[%c4, %c128] : memref<8x512xf32, #tpu.memory_space<vmem>>, vector<4x256xf32>
    tpu.vector_store %arg8[%c4, %c128], %8 {strides = array<i32>} : memref<8x512xf32, #tpu.memory_space<vmem>>, vector<4x256xf32>,
    %c0_10 = arith.constant 0 : index
    %c0_11 = arith.constant 0 : index
    %c0_12 = arith.constant 0 : index
    %10 = vector.load %arg2[%c0_10, %c0_11, %c0_12] : memref<1x4x256xf32, #tpu.memory_space<vmem>>, vector<1x4x256xf32>
    %11 = vector.shape_cast %10 : vector<1x4x256xf32> to vector<4x256xf32>
    %c0_13 = arith.constant 0 : index
    %c128_14 = arith.constant 128 : index
    %12 = vector.load %arg8[%c0_13, %c128_14] : memref<8x512xf32, #tpu.memory_space<vmem>>, vector<4x256xf32>
    tpu.vector_store %arg8[%c0_13, %c128_14], %11 {strides = array<i32>} : memref<8x512xf32, #tpu.memory_space<vmem>>, vector<4x256xf32>,
    %c0_15 = arith.constant 0 : index
    %c0_16 = arith.constant 0 : index
    %13 = vector.load %arg1[%c0_15, %c0_16] : memref<3x256xf32, #tpu.memory_space<vmem>>, vector<1x256xf32>
    %c1 = arith.constant 1 : index
    %c0_17 = arith.constant 0 : index
    %14 = vector.load %arg1[%c1, %c0_17] : memref<3x256xf32, #tpu.memory_space<vmem>>, vector<1x256xf32>
    %c0_18 = arith.constant 0 : index
    %c111 = arith.constant 111 : index
    %15 = vector.load %arg8[%c0_18, %c111] : memref<8x512xf32, #tpu.memory_space<vmem>>, vector<8x256xf32>
    %16 = vector.broadcast %13 : vector<1x256xf32> to vector<8x256xf32>
    %17 = arith.mulf %15, %16 : vector<8x256xf32>
    %c0_19 = arith.constant 0 : index
    %c0_20 = arith.constant 0 : index
    %18 = vector.load %arg10[%c0_19, %c0_20] : memref<72x256xf32, #tpu.memory_space<vmem>>, vector<8x256xf32>
    tpu.vector_store %arg10[%c0_19, %c0_20], %17 {strides = array<i32>} : memref<72x256xf32, #tpu.memory_space<vmem>>, vector<8x256xf32>,
    %c0_21 = arith.constant 0 : index
    %c112 = arith.constant 112 : index
    %19 = vector.load %arg8[%c0_21, %c112] : memref<8x512xf32, #tpu.memory_space<vmem>>, vector<8x256xf32>
    %c8 = arith.constant 8 : index
    %c0_22 = arith.constant 0 : index
    %20 = vector.load %arg10[%c8, %c0_22] : memref<72x256xf32, #tpu.memory_space<vmem>>, vector<8x256xf32>
    tpu.vector_store %arg10[%c8, %c0_22], %19 {strides = array<i32>} : memref<72x256xf32, #tpu.memory_space<vmem>>, vector<8x256xf32>,
    %c0_23 = arith.constant 0 : index
    %c113 = arith.constant 113 : index
    %21 = vector.load %arg8[%c0_23, %c113] : memref<8x512xf32, #tpu.memory_space<vmem>>, vector<8x256xf32>
    %22 = vector.broadcast %14 : vector<1x256xf32> to vector<8x256xf32>
    %23 = arith.mulf %21, %22 : vector<8x256xf32>
    %c16 = arith.constant 16 : index
    %c0_24 = arith.constant 0 : index
    %24 = vector.load %arg10[%c16, %c0_24] : memref<72x256xf32, #tpu.memory_space<vmem>>, vector<8x256xf32>
    tpu.vector_store %arg10[%c16, %c0_24], %23 {strides = array<i32>} : memref<72x256xf32, #tpu.memory_space<vmem>>, vector<8x256xf32>,
    %c0_25 = arith.constant 0 : index
    %c127 = arith.constant 127 : index
    %25 = vector.load %arg8[%c0_25, %c127] : memref<8x512xf32, #tpu.memory_space<vmem>>, vector<8x256xf32>
    %26 = vector.broadcast %13 : vector<1x256xf32> to vector<8x256xf32>
    %27 = arith.mulf %25, %26 : vector<8x256xf32>
    %c24 = arith.constant 24 : index
    %c0_26 = arith.constant 0 : index
    %28 = vector.load %arg10[%c24, %c0_26] : memref<72x256xf32, #tpu.memory_space<vmem>>, vector<8x256xf32>
    tpu.vector_store %arg10[%c24, %c0_26], %27 {strides = array<i32>} : memref<72x256xf32, #tpu.memory_space<vmem>>, vector<8x256xf32>,
    %c0_27 = arith.constant 0 : index
    %c128_28 = arith.constant 128 : index
    %29 = vector.load %arg8[%c0_27, %c128_28] : memref<8x512xf32, #tpu.memory_space<vmem>>, vector<8x256xf32>
    %c32 = arith.constant 32 : index
    %c0_29 = arith.constant 0 : index
    %30 = vector.load %arg10[%c32, %c0_29] : memref<72x256xf32, #tpu.memory_space<vmem>>, vector<8x256xf32>
    tpu.vector_store %arg10[%c32, %c0_29], %29 {strides = array<i32>} : memref<72x256xf32, #tpu.memory_space<vmem>>, vector<8x256xf32>,
    %c0_30 = arith.constant 0 : index
    %c129 = arith.constant 129 : index
    %31 = vector.load %arg8[%c0_30, %c129] : memref<8x512xf32, #tpu.memory_space<vmem>>, vector<8x256xf32>
    %32 = vector.broadcast %14 : vector<1x256xf32> to vector<8x256xf32>
    %33 = arith.mulf %31, %32 : vector<8x256xf32>
    %c40 = arith.constant 40 : index
    %c0_31 = arith.constant 0 : index
    %34 = vector.load %arg10[%c40, %c0_31] : memref<72x256xf32, #tpu.memory_space<vmem>>, vector<8x256xf32>
    tpu.vector_store %arg10[%c40, %c0_31], %33 {strides = array<i32>} : memref<72x256xf32, #tpu.memory_space<vmem>>, vector<8x256xf32>,
    %c0_32 = arith.constant 0 : index
    %c143 = arith.constant 143 : index
    %35 = vector.load %arg8[%c0_32, %c143] : memref<8x512xf32, #tpu.memory_space<vmem>>, vector<8x256xf32>
    %36 = vector.broadcast %13 : vector<1x256xf32> to vector<8x256xf32>
    %37 = arith.mulf %35, %36 : vector<8x256xf32>
    %c48 = arith.constant 48 : index
    %c0_33 = arith.constant 0 : index
    %38 = vector.load %arg10[%c48, %c0_33] : memref<72x256xf32, #tpu.memory_space<vmem>>, vector<8x256xf32>
    tpu.vector_store %arg10[%c48, %c0_33], %37 {strides = array<i32>} : memref<72x256xf32, #tpu.memory_space<vmem>>, vector<8x256xf32>,
    %c0_34 = arith.constant 0 : index
    %c144 = arith.constant 144 : index
    %39 = vector.load %arg8[%c0_34, %c144] : memref<8x512xf32, #tpu.memory_space<vmem>>, vector<8x256xf32>
    %c56 = arith.constant 56 : index
    %c0_35 = arith.constant 0 : index
    %40 = vector.load %arg10[%c56, %c0_35] : memref<72x256xf32, #tpu.memory_space<vmem>>, vector<8x256xf32>
    tpu.vector_store %arg10[%c56, %c0_35], %39 {strides = array<i32>} : memref<72x256xf32, #tpu.memory_space<vmem>>, vector<8x256xf32>,
    %c0_36 = arith.constant 0 : index
    %c145 = arith.constant 145 : index
    %41 = vector.load %arg8[%c0_36, %c145] : memref<8x512xf32, #tpu.memory_space<vmem>>, vector<8x256xf32>
    %42 = vector.broadcast %14 : vector<1x256xf32> to vector<8x256xf32>
    %43 = arith.mulf %41, %42 : vector<8x256xf32>
    %c64 = arith.constant 64 : index
    %c0_37 = arith.constant 0 : index
    %44 = vector.load %arg10[%c64, %c0_37] : memref<72x256xf32, #tpu.memory_space<vmem>>, vector<8x256xf32>
    tpu.vector_store %arg10[%c64, %c0_37], %43 {strides = array<i32>} : memref<72x256xf32, #tpu.memory_space<vmem>>, vector<8x256xf32>,
    %c0_38 = arith.constant 0 : index
    %c0_39 = arith.constant 0 : index
    %45 = vector.load %arg3[%c0_38, %c0_39] : memref<8x72xf32, #tpu.memory_space<vmem>>, vector<8x72xf32>
    %c0_40 = arith.constant 0 : index
    %c0_41 = arith.constant 0 : index
    %46 = vector.load %arg10[%c0_40, %c0_41] : memref<72x256xf32, #tpu.memory_space<vmem>>, vector<72x256xf32>
    %cst_42 = arith.constant dense<0.000000e+00> : vector<8x256xf32>
    %47 = tpu.matmul %45, %46, %cst_42 {dimension_numbers = #tpu.dot_dimension_numbers<[1], [0], [0], [1], [0, 0, 1, 1], [], []>} : vector<8x72xf32>, vector<72x256xf32>, vector<8x256xf32> -> vector<8x256xf32>
    %c0_43 = arith.constant 0 : index
    %c0_44 = arith.constant 0 : index
    %48 = vector.load %arg4[%c0_43, %c0_44] : memref<8x1xf32, #tpu.memory_space<vmem>>, vector<8x1xf32>
    %49 = vector.broadcast %48 : vector<8x1xf32> to vector<8x256xf32>
    %50 = arith.addf %47, %49 : vector<8x256xf32>
    %cst_45 = arith.constant 0.000000e+00 : f32
    %51 = vector.broadcast %cst_45 : f32 to vector<8x256xf32>
    %52 = arith.maximumf %50, %51 : vector<8x256xf32>
    %c0_46 = arith.constant 0 : index
    %c128_47 = arith.constant 128 : index
    %53 = vector.load %arg9[%c0_46, %c128_47] : memref<8x512xf32, #tpu.memory_space<vmem>>, vector<8x256xf32>
    tpu.vector_store %arg9[%c0_46, %c128_47], %52 {strides = array<i32>} : memref<8x512xf32, #tpu.memory_space<vmem>>, vector<8x256xf32>,
    %c0_48 = arith.constant 0 : index
    %c111_49 = arith.constant 111 : index
    %54 = vector.load %arg9[%c0_48, %c111_49] : memref<8x512xf32, #tpu.memory_space<vmem>>, vector<8x256xf32>
    %55 = vector.broadcast %13 : vector<1x256xf32> to vector<8x256xf32>
    %56 = arith.mulf %54, %55 : vector<8x256xf32>
    %c0_50 = arith.constant 0 : index
    %c0_51 = arith.constant 0 : index
    %57 = vector.load %arg10[%c0_50, %c0_51] : memref<72x256xf32, #tpu.memory_space<vmem>>, vector<8x256xf32>
    tpu.vector_store %arg10[%c0_50, %c0_51], %56 {strides = array<i32>} : memref<72x256xf32, #tpu.memory_space<vmem>>, vector<8x256xf32>,
    %c0_52 = arith.constant 0 : index
    %c112_53 = arith.constant 112 : index
    %58 = vector.load %arg9[%c0_52, %c112_53] : memref<8x512xf32, #tpu.memory_space<vmem>>, vector<8x256xf32>
    %c8_54 = arith.constant 8 : index
    %c0_55 = arith.constant 0 : index
    %59 = vector.load %arg10[%c8_54, %c0_55] : memref<72x256xf32, #tpu.memory_space<vmem>>, vector<8x256xf32>
    tpu.vector_store %arg10[%c8_54, %c0_55], %58 {strides = array<i32>} : memref<72x256xf32, #tpu.memory_space<vmem>>, vector<8x256xf32>,
    %c0_56 = arith.constant 0 : index
    %c113_57 = arith.constant 113 : index
    %60 = vector.load %arg9[%c0_56, %c113_57] : memref<8x512xf32, #tpu.memory_space<vmem>>, vector<8x256xf32>
    %61 = vector.broadcast %14 : vector<1x256xf32> to vector<8x256xf32>
    %62 = arith.mulf %60, %61 : vector<8x256xf32>
    %c16_58 = arith.constant 16 : index
    %c0_59 = arith.constant 0 : index
    %63 = vector.load %arg10[%c16_58, %c0_59] : memref<72x256xf32, #tpu.memory_space<vmem>>, vector<8x256xf32>
    tpu.vector_store %arg10[%c16_58, %c0_59], %62 {strides = array<i32>} : memref<72x256xf32, #tpu.memory_space<vmem>>, vector<8x256xf32>,
    %c0_60 = arith.constant 0 : index
    %c127_61 = arith.constant 127 : index
    %64 = vector.load %arg9[%c0_60, %c127_61] : memref<8x512xf32, #tpu.memory_space<vmem>>, vector<8x256xf32>
    %65 = vector.broadcast %13 : vector<1x256xf32> to vector<8x256xf32>
    %66 = arith.mulf %64, %65 : vector<8x256xf32>
    %c24_62 = arith.constant 24 : index
    %c0_63 = arith.constant 0 : index
    %67 = vector.load %arg10[%c24_62, %c0_63] : memref<72x256xf32, #tpu.memory_space<vmem>>, vector<8x256xf32>
    tpu.vector_store %arg10[%c24_62, %c0_63], %66 {strides = array<i32>} : memref<72x256xf32, #tpu.memory_space<vmem>>, vector<8x256xf32>,
    %c0_64 = arith.constant 0 : index
    %c128_65 = arith.constant 128 : index
    %68 = vector.load %arg9[%c0_64, %c128_65] : memref<8x512xf32, #tpu.memory_space<vmem>>, vector<8x256xf32>
    %c32_66 = arith.constant 32 : index
    %c0_67 = arith.constant 0 : index
    %69 = vector.load %arg10[%c32_66, %c0_67] : memref<72x256xf32, #tpu.memory_space<vmem>>, vector<8x256xf32>
    tpu.vector_store %arg10[%c32_66, %c0_67], %68 {strides = array<i32>} : memref<72x256xf32, #tpu.memory_space<vmem>>, vector<8x256xf32>,
    %c0_68 = arith.constant 0 : index
    %c129_69 = arith.constant 129 : index
    %70 = vector.load %arg9[%c0_68, %c129_69] : memref<8x512xf32, #tpu.memory_space<vmem>>, vector<8x256xf32>
    %71 = vector.broadcast %14 : vector<1x256xf32> to vector<8x256xf32>
    %72 = arith.mulf %70, %71 : vector<8x256xf32>
    %c40_70 = arith.constant 40 : index
    %c0_71 = arith.constant 0 : index
    %73 = vector.load %arg10[%c40_70, %c0_71] : memref<72x256xf32, #tpu.memory_space<vmem>>, vector<8x256xf32>
    tpu.vector_store %arg10[%c40_70, %c0_71], %72 {strides = array<i32>} : memref<72x256xf32, #tpu.memory_space<vmem>>, vector<8x256xf32>,
    %c0_72 = arith.constant 0 : index
    %c143_73 = arith.constant 143 : index
    %74 = vector.load %arg9[%c0_72, %c143_73] : memref<8x512xf32, #tpu.memory_space<vmem>>, vector<8x256xf32>
    %75 = vector.broadcast %13 : vector<1x256xf32> to vector<8x256xf32>
    %76 = arith.mulf %74, %75 : vector<8x256xf32>
    %c48_74 = arith.constant 48 : index
    %c0_75 = arith.constant 0 : index
    %77 = vector.load %arg10[%c48_74, %c0_75] : memref<72x256xf32, #tpu.memory_space<vmem>>, vector<8x256xf32>
    tpu.vector_store %arg10[%c48_74, %c0_75], %76 {strides = array<i32>} : memref<72x256xf32, #tpu.memory_space<vmem>>, vector<8x256xf32>,
    %c0_76 = arith.constant 0 : index
    %c144_77 = arith.constant 144 : index
    %78 = vector.load %arg9[%c0_76, %c144_77] : memref<8x512xf32, #tpu.memory_space<vmem>>, vector<8x256xf32>
    %c56_78 = arith.constant 56 : index
    %c0_79 = arith.constant 0 : index
    %79 = vector.load %arg10[%c56_78, %c0_79] : memref<72x256xf32, #tpu.memory_space<vmem>>, vector<8x256xf32>
    tpu.vector_store %arg10[%c56_78, %c0_79], %78 {strides = array<i32>} : memref<72x256xf32, #tpu.memory_space<vmem>>, vector<8x256xf32>,
    %c0_80 = arith.constant 0 : index
    %c145_81 = arith.constant 145 : index
    %80 = vector.load %arg9[%c0_80, %c145_81] : memref<8x512xf32, #tpu.memory_space<vmem>>, vector<8x256xf32>
    %81 = vector.broadcast %14 : vector<1x256xf32> to vector<8x256xf32>
    %82 = arith.mulf %80, %81 : vector<8x256xf32>
    %c64_82 = arith.constant 64 : index
    %c0_83 = arith.constant 0 : index
    %83 = vector.load %arg10[%c64_82, %c0_83] : memref<72x256xf32, #tpu.memory_space<vmem>>, vector<8x256xf32>
    tpu.vector_store %arg10[%c64_82, %c0_83], %82 {strides = array<i32>} : memref<72x256xf32, #tpu.memory_space<vmem>>, vector<8x256xf32>,
    %c0_84 = arith.constant 0 : index
    %c0_85 = arith.constant 0 : index
    %84 = vector.load %arg5[%c0_84, %c0_85] : memref<32x72xf32, #tpu.memory_space<vmem>>, vector<32x72xf32>
    %c0_86 = arith.constant 0 : index
    %c0_87 = arith.constant 0 : index
    %85 = vector.load %arg10[%c0_86, %c0_87] : memref<72x256xf32, #tpu.memory_space<vmem>>, vector<72x256xf32>
    %cst_88 = arith.constant dense<0.000000e+00> : vector<32x256xf32>
    %86 = tpu.matmul %84, %85, %cst_88 {dimension_numbers = #tpu.dot_dimension_numbers<[1], [0], [0], [1], [0, 0, 1, 1], [], []>} : vector<32x72xf32>, vector<72x256xf32>, vector<32x256xf32> -> vector<32x256xf32>
    %c0_89 = arith.constant 0 : index
    %c0_90 = arith.constant 0 : index
    %87 = vector.load %arg6[%c0_89, %c0_90] : memref<32x1xf32, #tpu.memory_space<vmem>>, vector<32x1xf32>
    %88 = vector.broadcast %87 : vector<32x1xf32> to vector<32x256xf32>
    %89 = arith.addf %86, %88 : vector<32x256xf32>
    %cst_91 = arith.constant 0.000000e+00 : f32
    %90 = vector.broadcast %cst_91 : f32 to vector<32x256xf32>
    %91 = arith.maximumf %89, %90 : vector<32x256xf32>
    %92 = vector.extract_strided_slice %91 {offsets = [0, 0], sizes = [8, 256], strides = [1, 1]} : vector<32x256xf32> to vector<8x256xf32>
    %c0_92 = arith.constant 0 : index
    %c0_93 = arith.constant 0 : index
    %c0_94 = arith.constant 0 : index
    %c0_95 = arith.constant 0 : index
    %c0_96 = arith.constant 0 : index
    %93 = vector.load %arg7[%c0_92, %c0_93, %c0_94, %c0_95, %c0_96] : memref<1x2x2x8x256xf32, #tpu.memory_space<vmem>>, vector<1x1x1x8x256xf32>
    %94 = vector.shape_cast %93 : vector<1x1x1x8x256xf32> to vector<8x256xf32>
    %95 = vector.shape_cast %92 : vector<8x256xf32> to vector<1x1x1x8x256xf32>
    tpu.vector_store %arg7[%c0_92, %c0_93, %c0_94, %c0_95, %c0_96], %95 {strides = array<i32>} : memref<1x2x2x8x256xf32, #tpu.memory_space<vmem>>, vector<1x1x1x8x256xf32>,
    %96 = vector.extract_strided_slice %91 {offsets = [8, 0], sizes = [8, 256], strides = [1, 1]} : vector<32x256xf32> to vector<8x256xf32>
    %c0_97 = arith.constant 0 : index
    %c0_98 = arith.constant 0 : index
    %c1_99 = arith.constant 1 : index
    %c0_100 = arith.constant 0 : index
    %c0_101 = arith.constant 0 : index
    %97 = vector.load %arg7[%c0_97, %c0_98, %c1_99, %c0_100, %c0_101] : memref<1x2x2x8x256xf32, #tpu.memory_space<vmem>>, vector<1x1x1x8x256xf32>
    %98 = vector.shape_cast %97 : vector<1x1x1x8x256xf32> to vector<8x256xf32>
    %99 = vector.shape_cast %96 : vector<8x256xf32> to vector<1x1x1x8x256xf32>
    tpu.vector_store %arg7[%c0_97, %c0_98, %c1_99, %c0_100, %c0_101], %99 {strides = array<i32>} : memref<1x2x2x8x256xf32, #tpu.memory_space<vmem>>, vector<1x1x1x8x256xf32>,
    %100 = vector.extract_strided_slice %91 {offsets = [16, 0], sizes = [8, 256], strides = [1, 1]} : vector<32x256xf32> to vector<8x256xf32>
    %c0_102 = arith.constant 0 : index
    %c1_103 = arith.constant 1 : index
    %c0_104 = arith.constant 0 : index
    %c0_105 = arith.constant 0 : index
    %c0_106 = arith.constant 0 : index
    %101 = vector.load %arg7[%c0_102, %c1_103, %c0_104, %c0_105, %c0_106] : memref<1x2x2x8x256xf32, #tpu.memory_space<vmem>>, vector<1x1x1x8x256xf32>
    %102 = vector.shape_cast %101 : vector<1x1x1x8x256xf32> to vector<8x256xf32>
    %103 = vector.shape_cast %100 : vector<8x256xf32> to vector<1x1x1x8x256xf32>
    tpu.vector_store %arg7[%c0_102, %c1_103, %c0_104, %c0_105, %c0_106], %103 {strides = array<i32>} : memref<1x2x2x8x256xf32, #tpu.memory_space<vmem>>, vector<1x1x1x8x256xf32>,
    %104 = vector.extract_strided_slice %91 {offsets = [24, 0], sizes = [8, 256], strides = [1, 1]} : vector<32x256xf32> to vector<8x256xf32>
    %c0_107 = arith.constant 0 : index
    %c1_108 = arith.constant 1 : index
    %c1_109 = arith.constant 1 : index
    %c0_110 = arith.constant 0 : index
    %c0_111 = arith.constant 0 : index
    %105 = vector.load %arg7[%c0_107, %c1_108, %c1_109, %c0_110, %c0_111] : memref<1x2x2x8x256xf32, #tpu.memory_space<vmem>>, vector<1x1x1x8x256xf32>
    %106 = vector.shape_cast %105 : vector<1x1x1x8x256xf32> to vector<8x256xf32>
    %107 = vector.shape_cast %104 : vector<8x256xf32> to vector<1x1x1x8x256xf32>
    tpu.vector_store %arg7[%c0_107, %c1_108, %c1_109, %c0_110, %c0_111], %107 {strides = array<i32>} : memref<1x2x2x8x256xf32, #tpu.memory_space<vmem>>, vector<1x1x1x8x256xf32>,
    return
  }
  func.func @transform_0(%arg0: i32) -> (i32, i32) {
    %c0_i32 = arith.constant 0 : i32
    %c0_i32_0 = arith.constant 0 : i32
    %c0_i32_1 = arith.constant 0 : i32
    return %c0_i32, %c0_i32_0 : i32, i32
  }
  func.func @transform_1(%arg0: i32) -> (i32, i32, i32) {
    %c0_i32 = arith.constant 0 : i32
    %c0_i32_0 = arith.constant 0 : i32
    %c0_i32_1 = arith.constant 0 : i32
    return %arg0, %c0_i32, %c0_i32_0 : i32, i32, i32
  }
  func.func @transform_2(%arg0: i32) -> (i32, i32) {
    %c0_i32 = arith.constant 0 : i32
    %c0_i32_0 = arith.constant 0 : i32
    %c0_i32_1 = arith.constant 0 : i32
    return %c0_i32, %c0_i32_0 : i32, i32
  }
  func.func @transform_3(%arg0: i32) -> (i32, i32) {
    %c0_i32 = arith.constant 0 : i32
    %c0_i32_0 = arith.constant 0 : i32
    %c0_i32_1 = arith.constant 0 : i32
    return %c0_i32, %c0_i32_0 : i32, i32
  }
  func.func @transform_4(%arg0: i32) -> (i32, i32) {
    %c0_i32 = arith.constant 0 : i32
    %c0_i32_0 = arith.constant 0 : i32
    %c0_i32_1 = arith.constant 0 : i32
    return %c0_i32, %c0_i32_0 : i32, i32
  }
  func.func @transform_5(%arg0: i32) -> (i32, i32) {
    %c0_i32 = arith.constant 0 : i32
    %c0_i32_0 = arith.constant 0 : i32
    %c0_i32_1 = arith.constant 0 : i32
    return %c0_i32, %c0_i32_0 : i32, i32
  }
  func.func @transform_6(%arg0: i32) -> (i32, i32, i32, i32, i32) {
    %c0_i32 = arith.constant 0 : i32
    %c0_i32_0 = arith.constant 0 : i32
    %c0_i32_1 = arith.constant 0 : i32
    %c0_i32_2 = arith.constant 0 : i32
    %c0_i32_3 = arith.constant 0 : i32
    return %arg0, %c0_i32, %c0_i32_0, %c0_i32_1, %c0_i32_2 : i32, i32, i32, i32, i32
  }
}

</mosaic_0001>

<llo_original>
// kernel: decoder_block_v2.1
$region0: #{decoder_block_v2.1}
  #allocation0 [shape = 'u32[]', space=smem, size = 0x4, offset = 0x4, fixed_abs, tag = 'smem constant byte address 0x4 - core index']
  #allocation1 [shape = 'u32[72,128]{1,0:T(1,128)}', space=vmem, size = 0x9000, scoped, tag = 'internal scratch']
  #allocation2 [shape = 'f32[8,512]{1,0:T(8,128)}', space=vmem, size = 0x4000, scoped, tag = 'scratch operand']
  #allocation3 [shape = 'f32[8,512]{1,0:T(8,128)}', space=vmem, size = 0x4000, scoped, tag = 'scratch operand']
  #allocation4 [shape = 'f32[72,256]{1,0:T(8,128)}', space=vmem, size = 0x12000, scoped, tag = 'scratch operand']
  %s0 = inlined_call_operand.vmem [shape: f32[3,256], index: 0, kind: input, shape index: {}]
  %s1 = inlined_call_operand.vmem [shape: f32[2,4,256], index: 1, kind: input, shape index: {}]
  %s2 = inlined_call_operand.vmem [shape: f32[8,72], index: 2, kind: input, shape index: {}]
  %s3 = inlined_call_operand.vmem [shape: f32[8,1], index: 3, kind: input, shape index: {}]
  %s4 = inlined_call_operand.vmem [shape: f32[32,72], index: 4, kind: input, shape index: {}]
  %s5 = inlined_call_operand.vmem [shape: f32[32,1], index: 5, kind: input, shape index: {}]
  %s6 = inlined_call_operand.vmem [shape: f32[2,2,2,8,256], index: 6, kind: output, shape index: {}]
  %s7 = sld [smem:[#allocation0]]
  $region57: #{decoder_block_v2.1} parent=0
    _
  %s9 = ssub.s32 1, %s7
  %s10 = scalar_select 0, %s9, %s7
  loop: start=0, step=1, limit=4
  $region2: #{decoder_block_v2.1} parent=0 // loop_pre_header
    _
  $region3: #{decoder_block_v2.1} parent=0 // loop_header
    %s12 = sphi 0, %s16
    %p13 = scmp.ge.s32.totalorder %s12, 4
    %s20 = sphi 0, %s20
    %s22 = sphi 0, %s20
    %s23 = sphi 0, %s22
    %s37 = sphi 0, %s23
    %s43 = sphi 0, %s45
    %s46 = sphi 0, %s43
    %s47 = sphi 0, %s46
    %s63 = sphi 0, %s47
    %s67 = sphi 0, %s67
    %s69 = sphi 0, %s67
    %s70 = sphi 0, %s69
    %s84 = sphi 0, %s70
    %s88 = sphi 0, %s88
    %s90 = sphi 0, %s88
    %s91 = sphi 0, %s90
    %s105 = sphi 0, %s91
    %s109 = sphi 0, %s109
    %s111 = sphi 0, %s109
    %s112 = sphi 0, %s111
    %s126 = sphi 0, %s112
    %s130 = sphi 0, %s130
    %s132 = sphi 0, %s130
    %s133 = sphi 0, %s132
    %s147 = sphi 0, %s133
    %s153 = sphi 0, %s155
    %s156 = sphi 0, %s153
    %s157 = sphi 0, %s156
    %s173 = sphi 0, %s157
  $region4: #{decoder_block_v2.1} parent=0 // loop_header_branch
    %15 = sbr.rel (%p13) target = $region8
  $region5: #{decoder_block_v2.1} parent=0 // loop_body
    %s17 = ssub.s32 %s12, 1
    %s18 = ssub.s32 %s12, 2
    %s19 = sadd.s32 %s12, 1
    %s21 = sadd.s32 %s20, 1
    %p24 = scmp.eq.s32.totalorder %s12, 1
    %p25 = scmp.ne.s32.totalorder %s20, %s22
    %p26 = scmp.eq.s32.totalorder %s12, 0
    %p27 = por %p25, %p26
    %p28 = scmp.ne.s32.totalorder %s20, %s22
    %p29 = scmp.eq.s32.totalorder %s17, 1
    %p30 = por %p28, %p29
    %p31 = scmp.ne.s32.totalorder %s22, %s23
    %p32 = scmp.eq.s32.totalorder %s17, 0
    %p33 = por %p31, %p32
    %p34 = scmp.ne.s32.totalorder %s22, %s23
    %p35 = scmp.eq.s32.totalorder %s18, 1
    %p36 = por %p34, %p35
    %p38 = scmp.ne.s32.totalorder %s23, %s37
    %p39 = scmp.eq.s32.totalorder %s18, 0
    %p40 = por %p38, %p39
    %s41 = ssub.s32 %s12, %s19
    %p42 = scmp.eq.s32.totalorder %s41, 0
    %s44 = sadd.s32 %s43, 1
    %s45 = scalar_select %p42, %s43, %s44
    %p48 = pneg %p42
    %p49 = scmp.eq.s32.totalorder %s12, 1
    %p50 = por %p48, %p49
    %p51 = scmp.ne.s32.totalorder %s43, %s46
    %p52 = scmp.eq.s32.totalorder %s12, 0
    %p53 = por %p51, %p52
    %p54 = scmp.ne.s32.totalorder %s43, %s46
    %p55 = scmp.eq.s32.totalorder %s17, 1
    %p56 = por %p54, %p55
    %p57 = scmp.ne.s32.totalorder %s46, %s47
    %p58 = scmp.eq.s32.totalorder %s17, 0
    %p59 = por %p57, %p58
    %p60 = scmp.ne.s32.totalorder %s46, %s47
    %p61 = scmp.eq.s32.totalorder %s18, 1
    %p62 = por %p60, %p61
    %p64 = scmp.ne.s32.totalorder %s47, %s63
    %p65 = scmp.eq.s32.totalorder %s18, 0
    %p66 = por %p64, %p65
    %s68 = sadd.s32 %s67, 1
    %p71 = scmp.eq.s32.totalorder %s12, 1
    %p72 = scmp.ne.s32.totalorder %s67, %s69
    %p73 = scmp.eq.s32.totalorder %s12, 0
    %p74 = por %p72, %p73
    %p75 = scmp.ne.s32.totalorder %s67, %s69
    %p76 = scmp.eq.s32.totalorder %s17, 1
    %p77 = por %p75, %p76
    %p78 = scmp.ne.s32.totalorder %s69, %s70
    %p79 = scmp.eq.s32.totalorder %s17, 0
    %p80 = por %p78, %p79
    %p81 = scmp.ne.s32.totalorder %s69, %s70
    %p82 = scmp.eq.s32.totalorder %s18, 1
    %p83 = por %p81, %p82
    %p85 = scmp.ne.s32.totalorder %s70, %s84
    %p86 = scmp.eq.s32.totalorder %s18, 0
    %p87 = por %p85, %p86
    %s89 = sadd.s32 %s88, 1
    %p92 = scmp.eq.s32.totalorder %s12, 1
    %p93 = scmp.ne.s32.totalorder %s88, %s90
    %p94 = scmp.eq.s32.totalorder %s12, 0
    %p95 = por %p93, %p94
    %p96 = scmp.ne.s32.totalorder %s88, %s90
    %p97 = scmp.eq.s32.totalorder %s17, 1
    %p98 = por %p96, %p97
    %p99 = scmp.ne.s32.totalorder %s90, %s91
    %p100 = scmp.eq.s32.totalorder %s17, 0
    %p101 = por %p99, %p100
    %p102 = scmp.ne.s32.totalorder %s90, %s91
    %p103 = scmp.eq.s32.totalorder %s18, 1
    %p104 = por %p102, %p103
    %p106 = scmp.ne.s32.totalorder %s91, %s105
    %p107 = scmp.eq.s32.totalorder %s18, 0
    %p108 = por %p106, %p107
    %s110 = sadd.s32 %s109, 1
    %p113 = scmp.eq.s32.totalorder %s12, 1
    %p114 = scmp.ne.s32.totalorder %s109, %s111
    %p115 = scmp.eq.s32.totalorder %s12, 0
    %p116 = por %p114, %p115
    %p117 = scmp.ne.s32.totalorder %s109, %s111
    %p118 = scmp.eq.s32.totalorder %s17, 1
    %p119 = por %p117, %p118
    %p120 = scmp.ne.s32.totalorder %s111, %s112
    %p121 = scmp.eq.s32.totalorder %s17, 0
    %p122 = por %p120, %p121
    %p123 = scmp.ne.s32.totalorder %s111, %s112
    %p124 = scmp.eq.s32.totalorder %s18, 1
    %p125 = por %p123, %p124
    %p127 = scmp.ne.s32.totalorder %s112, %s126
    %p128 = scmp.eq.s32.totalorder %s18, 0
    %p129 = por %p127, %p128
    %s131 = sadd.s32 %s130, 1
    %p134 = scmp.eq.s32.totalorder %s12, 1
    %p135 = scmp.ne.s32.totalorder %s130, %s132
    %p136 = scmp.eq.s32.totalorder %s12, 0
    %p137 = por %p135, %p136
    %p138 = scmp.ne.s32.totalorder %s130, %s132
    %p139 = scmp.eq.s32.totalorder %s17, 1
    %p140 = por %p138, %p139
    %p141 = scmp.ne.s32.totalorder %s132, %s133
    %p142 = scmp.eq.s32.totalorder %s17, 0
    %p143 = por %p141, %p142
    %p144 = scmp.ne.s32.totalorder %s132, %s133
    %p145 = scmp.eq.s32.totalorder %s18, 1
    %p146 = por %p144, %p145
    %p148 = scmp.ne.s32.totalorder %s133, %s147
    %p149 = scmp.eq.s32.totalorder %s18, 0
    %p150 = por %p148, %p149
    %s151 = ssub.s32 %s12, %s19
    %p152 = scmp.eq.s32.totalorder %s151, 0
    %s154 = sadd.s32 %s153, 1
    %s155 = scalar_select %p152, %s153, %s154
    %p158 = pneg %p152
    %p159 = scmp.eq.s32.totalorder %s12, 1
    %p160 = por %p158, %p159
    %p161 = scmp.ne.s32.totalorder %s153, %s156
    %p162 = scmp.eq.s32.totalorder %s12, 0
    %p163 = por %p161, %p162
    %p164 = scmp.ne.s32.totalorder %s153, %s156
    %p165 = scmp.eq.s32.totalorder %s17, 1
    %p166 = por %p164, %p165
    %p167 = scmp.ne.s32.totalorder %s156, %s157
    %p168 = scmp.eq.s32.totalorder %s17, 0
    %p169 = por %p167, %p168
    %p170 = scmp.ne.s32.totalorder %s156, %s157
    %p171 = scmp.eq.s32.totalorder %s18, 1
    %p172 = por %p170, %p171
    %p174 = scmp.ne.s32.totalorder %s157, %s173
    %p175 = scmp.eq.s32.totalorder %s18, 0
    %p176 = por %p174, %p175
    %p177 = scmp.le.s32.totalorder 1, %s12
    %p178 = scmp.lt.s32.totalorder %s12, 3
    %p179 = pnand %p177, %p178
    %p180 = pneg %p179
    // Predicated region
    $region9: #{decoder_block_v2.1} parent=5 // pred_check
      _
    $region10: #{decoder_block_v2.1} parent=5 // pred_check_branch
      %182 = sbr.rel (%p179) target = $region12
    $region11: #{decoder_block_v2.1} parent=5 // pred_region
      %s183 = ssub.s32 %s12, 1
      // Predicated region
      $region13: #{decoder_block_v2.1} parent=11 // pred_check
        %p184 = pneg %p33
      $region14: #{decoder_block_v2.1} parent=11 // pred_check_branch
        %186 = sbr.rel (%p184) target = $region16
      $region15: #{decoder_block_v2.1} parent=11 // pred_region
        _
      $region16: #{decoder_block_v2.1} parent=11 // pred_fallthru
        _
      // Predicated region
      $region17: #{decoder_block_v2.1} parent=11 // pred_check
        %p187 = pneg %p80
      $region18: #{decoder_block_v2.1} parent=11 // pred_check_branch
        %189 = sbr.rel (%p187) target = $region20
      $region19: #{decoder_block_v2.1} parent=11 // pred_region
        _
      $region20: #{decoder_block_v2.1} parent=11 // pred_fallthru
        _
      // Predicated region
      $region21: #{decoder_block_v2.1} parent=11 // pred_check
        %p190 = pneg %p101
      $region22: #{decoder_block_v2.1} parent=11 // pred_check_branch
        %192 = sbr.rel (%p190) target = $region24
      $region23: #{decoder_block_v2.1} parent=11 // pred_region
        _
      $region24: #{decoder_block_v2.1} parent=11 // pred_fallthru
        _
      // Predicated region
      $region25: #{decoder_block_v2.1} parent=11 // pred_check
        %p193 = pneg %p122
      $region26: #{decoder_block_v2.1} parent=11 // pred_check_branch
        %195 = sbr.rel (%p193) target = $region28
      $region27: #{decoder_block_v2.1} parent=11 // pred_region
        _
      $region28: #{decoder_block_v2.1} parent=11 // pred_fallthru
        _
      // Predicated region
      $region29: #{decoder_block_v2.1} parent=11 // pred_check
        %p196 = pneg %p143
      $region30: #{decoder_block_v2.1} parent=11 // pred_check_branch
        %198 = sbr.rel (%p196) target = $region32
      $region31: #{decoder_block_v2.1} parent=11 // pred_region
        _
      $region32: #{decoder_block_v2.1} parent=11 // pred_fallthru
        _
    $region12: #{decoder_block_v2.1} parent=5 // pred_fallthru
      _
    %p199 = scmp.lt.s32.totalorder %s12, 2
    // Predicated region
    $region33: #{decoder_block_v2.1} parent=5 // pred_check
      %p200 = pneg %p199
    $region34: #{decoder_block_v2.1} parent=5 // pred_check_branch
      %202 = sbr.rel (%p200) target = $region36
    $region35: #{decoder_block_v2.1} parent=5 // pred_region
      // Predicated region
      $region37: #{decoder_block_v2.1} parent=35 // pred_check
        %p203 = pneg %p53
      $region38: #{decoder_block_v2.1} parent=35 // pred_check_branch
        %205 = sbr.rel (%p203) target = $region40
      $region39: #{decoder_block_v2.1} parent=35 // pred_region
        %p206 = scmp.lt.s32.totalorder %s12, 1
        %s207 = scalar_select %p206, %s12, 1
        %s208 = smul.addr %s207, 2
        %s209 = smul.addr %s208, 4
        %s210 = scalar_lea.vmem %s1, %s209
      $region40: #{decoder_block_v2.1} parent=35 // pred_fallthru
        _
    $region36: #{decoder_block_v2.1} parent=5 // pred_fallthru
      _
    %p211 = scmp.le.s32.totalorder 1, %s12
    %p212 = scmp.lt.s32.totalorder %s12, 3
    %p213 = pnand %p211, %p212
    %p214 = pneg %p213
    // Predicated region
    $region41: #{decoder_block_v2.1} parent=5 // pred_check
      _
    $region42: #{decoder_block_v2.1} parent=5 // pred_check_branch
      %216 = sbr.rel (%p213) target = $region44
    $region43: #{decoder_block_v2.1} parent=5 // pred_region
      %s217 = ssub.s32 %s12, 1
      %p218 = pneg %p33
      %p219 = pneg %p30
      %p220 = scmp.lt.s32.totalorder %s17, 1
      %s221 = scalar_select %p220, %s17, 1
      %s222 = smul.addr %s221, 2
      %s223 = smul.addr %s222, 4
      %s224 = scalar_lea.vmem %s1, %s223
      %p225 = pneg %p59
      %p226 = pneg %p56
      %p227 = pneg %p80
      %p228 = pneg %p77
      %p229 = pneg %p101
      %p230 = pneg %p98
      %p231 = pneg %p122
      %p232 = pneg %p119
      %p233 = pneg %p143
      %p234 = pneg %p140
      %p235 = pneg %p169
      %p236 = pneg %p166
      %p237 = scmp.lt.s32.totalorder %s17, 1
      %s238 = scalar_select %p237, %s17, 1
      %s239 = smul.addr %s238, 8
      %s240 = smul.addr %s239, 8
      %s241 = scalar_lea.vmem %s6, %s240
      %p242 = scmp.lt.s32.totalorder %s17, 1
      %s243 = scalar_select %p242, %s17, 1
      %s244 = smul.addr %s243, 2
      %s245 = smul.addr %s244, 4
      %s246 = scalar_lea.vmem %s1, %s245
      %p247 = scmp.lt.s32.totalorder %s17, 1
      %s248 = scalar_select %p247, %s17, 1
      %s249 = smul.addr %s248, 8
      %s250 = smul.addr %s249, 8
      %s251 = scalar_lea.vmem %s6, %s250
      %252 = vst [vmem:[#allocation2] sm:$0xff] 0.0
      %253 = vst [vmem:[#allocation2 + $0x18] sm:$0xff] 0.0
      %254 = vst [vmem:[#allocation3] sm:$0xff] 0.0
      %255 = vst [vmem:[#allocation3 + $0x18] sm:$0xff] 0.0
      %256 = vst [vmem:[#allocation2 + $0x8] sm:$0xf0] 0.0
      %257 = vst [vmem:[#allocation2 + $0x10] sm:$0xf0] 0.0
      %v258 = vld [vmem:[%s246] sm:$0xff]
      %260 = vst [vmem:[#allocation1] ss:$2 sm:$0xff] %v258
      %v261 = vld.sshfl [vmem:[#allocation1] sm:$0xff pattern:$0x75316420]
      %v262 = vld.sshfl [vmem:[#allocation1 + $0x8] sm:$0xff pattern:$0x75316420]
      %265 = vst [vmem:[#allocation2 + $0x8] sm:$0xf] %v261
      %266 = vst [vmem:[#allocation2 + $0x10] sm:$0xf] %v262
      %v267 = vld [vmem:[%s0] ss:$4 sm:$0x3]
      %s268 = scalar_lea.vmem %s0, 1
      %v269 = vld [vmem:[%s268] ss:$4 sm:$0x3]
      %v270 = vld [vmem:[#allocation2] sm:$0xff]
      %v271 = vld [vmem:[#allocation2 + $0x8] sm:$0xff]
      %v272 = vld [vmem:[#allocation2 + $0x10] sm:$0xff]
      %v274 = vperm.slane %v267, 0
      %v275 = vperm.slane %v267, 1
      %276 = vrot.lane.b32.xlu0 %v274, 111
      %v277 = vpop.permute.xlu0 %276
      %278 = vrot.lane.b32.xlu0 %v275, 111
      %v279 = vpop.permute.xlu0 %278
      %vm280 = vcmask 908288
      %v281 = vsel %vm280, %v277, %v279
      %v285 = vmul.f32 %v270, %v277
      %v286 = vmul.f32 %v271, %v281
      %v287 = vmul.f32 %v272, %v279
      %291 = vrot.lane.b32.xlu0 %v285, 17
      %v292 = vpop.permute.xlu0 %291
      %293 = vrot.lane.b32.xlu0 %v286, 17
      %v294 = vpop.permute.xlu0 %293
      %295 = vrot.lane.b32.xlu0 %v287, 17
      %v296 = vpop.permute.xlu0 %295
      %vm297 = vcmask 138240
      %v298 = vsel %vm297, %v292, %v294
      %v299 = vsel %vm297, %v294, %v296
      %302 = vst [vmem:[#allocation4] sm:$0xff] %v298
      %303 = vst [vmem:[#allocation4 + $0x8] sm:$0xff] %v299
      %v304 = vld [vmem:[#allocation2] sm:$0xff]
      %v305 = vld [vmem:[#allocation2 + $0x8] sm:$0xff]
      %v306 = vld [vmem:[#allocation2 + $0x10] sm:$0xff]
      %310 = vrot.lane.b32.xlu0 %v304, 16
      %v311 = vpop.permute.xlu0 %310
      %312 = vrot.lane.b32.xlu0 %v305, 16
      %v313 = vpop.permute.xlu0 %312
      %314 = vrot.lane.b32.xlu0 %v306, 16
      %v315 = vpop.permute.xlu0 %314
      %vm316 = vcmask 130048
      %v317 = vsel %vm316, %v311, %v313
      %v318 = vsel %vm316, %v313, %v315
      %321 = vst [vmem:[#allocation4 + $0x10] sm:$0xff] %v317
      %322 = vst [vmem:[#allocation4 + $0x18] sm:$0xff] %v318
      %v323 = vld [vmem:[#allocation2] sm:$0xff]
      %v324 = vld [vmem:[#allocation2 + $0x8] sm:$0xff]
      %v325 = vld [vmem:[#allocation2 + $0x10] sm:$0xff]
      %v327 = vperm.slane %v269, 0
      %v328 = vperm.slane %v269, 1
      %329 = vrot.lane.b32.xlu0 %v327, 113
      %v330 = vpop.permute.xlu0 %329
      %331 = vrot.lane.b32.xlu0 %v328, 113
      %v332 = vpop.permute.xlu0 %331
      %vm333 = vcmask 924672
      %v334 = vsel %vm333, %v330, %v332
      %v338 = vmul.f32 %v323, %v330
      %v339 = vmul.f32 %v324, %v334
      %v340 = vmul.f32 %v325, %v332
      %344 = vrot.lane.b32.xlu0 %v338, 15
      %v345 = vpop.permute.xlu0 %344
      %346 = vrot.lane.b32.xlu0 %v339, 15
      %v347 = vpop.permute.xlu0 %346
      %348 = vrot.lane.b32.xlu0 %v340, 15
      %v349 = vpop.permute.xlu0 %348
      %vm350 = vcmask 121856
      %v351 = vsel %vm350, %v345, %v347
      %v352 = vsel %vm350, %v347, %v349
      %355 = vst [vmem:[#allocation4 + $0x20] sm:$0xff] %v351
      %356 = vst [vmem:[#allocation4 + $0x28] sm:$0xff] %v352
      %v357 = vld [vmem:[#allocation2] sm:$0xff]
      %v358 = vld [vmem:[#allocation2 + $0x8] sm:$0xff]
      %v359 = vld [vmem:[#allocation2 + $0x10] sm:$0xff]
      %360 = vrot.lane.b32.xlu0 %v274, 127
      %v361 = vpop.permute.xlu0 %360
      %362 = vrot.lane.b32.xlu0 %v275, 127
      %v363 = vpop.permute.xlu0 %362
      %vm364 = vcmask 1039360
      %v365 = vsel %vm364, %v361, %v363
      %v369 = vmul.f32 %v357, %v361
      %v370 = vmul.f32 %v358, %v365
      %v371 = vmul.f32 %v359, %v363
      %375 = vrot.lane.b32.xlu0 %v369, 1
      %v376 = vpop.permute.xlu0 %375
      %377 = vrot.lane.b32.xlu0 %v370, 1
      %v378 = vpop.permute.xlu0 %377
      %379 = vrot.lane.b32.xlu0 %v371, 1
      %v380 = vpop.permute.xlu0 %379
      %vm381 = vcmask 7168
      %v382 = vsel %vm381, %v376, %v378
      %v383 = vsel %vm381, %v378, %v380
      %386 = vst [vmem:[#allocation4 + $0x30] sm:$0xff] %v382
      %387 = vst [vmem:[#allocation4 + $0x38] sm:$0xff] %v383
      %v388 = vld [vmem:[#allocation2 + $0x8] sm:$0xff]
      %v389 = vld [vmem:[#allocation2 + $0x10] sm:$0xff]
      %390 = vst [vmem:[#allocation4 + $0x40] sm:$0xff] %v388
      %391 = vst [vmem:[#allocation4 + $0x48] sm:$0xff] %v389
      %v392 = vld [vmem:[#allocation2 + $0x8] sm:$0xff]
      %v393 = vld [vmem:[#allocation2 + $0x10] sm:$0xff]
      %v394 = vld [vmem:[#allocation2 + $0x18] sm:$0xff]
      %395 = vrot.lane.b32.xlu0 %v327, 1
      %v396 = vpop.permute.xlu0 %395
      %397 = vrot.lane.b32.xlu0 %v328, 1
      %v398 = vpop.permute.xlu0 %397
      %v399 = vsel %vm381, %v396, %v398
      %v403 = vmul.f32 %v392, %v396
      %v404 = vmul.f32 %v393, %v399
      %v405 = vmul.f32 %v394, %v398
      %409 = vrot.lane.b32.xlu0 %v403, 127
      %v410 = vpop.permute.xlu0 %409
      %411 = vrot.lane.b32.xlu0 %v404, 127
      %v412 = vpop.permute.xlu0 %411
      %413 = vrot.lane.b32.xlu0 %v405, 127
      %v414 = vpop.permute.xlu0 %413
      %v415 = vsel %vm364, %v410, %v412
      %v416 = vsel %vm364, %v412, %v414
      %419 = vst [vmem:[#allocation4 + $0x50] sm:$0xff] %v415
      %420 = vst [vmem:[#allocation4 + $0x58] sm:$0xff] %v416
      %v421 = vld [vmem:[#allocation2 + $0x8] sm:$0xff]
      %v422 = vld [vmem:[#allocation2 + $0x10] sm:$0xff]
      %v423 = vld [vmem:[#allocation2 + $0x18] sm:$0xff]
      %424 = vrot.lane.b32.xlu0 %v274, 15
      %v425 = vpop.permute.xlu0 %424
      %426 = vrot.lane.b32.xlu0 %v275, 15
      %v427 = vpop.permute.xlu0 %426
      %v428 = vsel %vm350, %v425, %v427
      %v432 = vmul.f32 %v421, %v425
      %v433 = vmul.f32 %v422, %v428
      %v434 = vmul.f32 %v423, %v427
      %438 = vrot.lane.b32.xlu0 %v432, 113
      %v439 = vpop.permute.xlu0 %438
      %440 = vrot.lane.b32.xlu0 %v433, 113
      %v441 = vpop.permute.xlu0 %440
      %442 = vrot.lane.b32.xlu0 %v434, 113
      %v443 = vpop.permute.xlu0 %442
      %v444 = vsel %vm333, %v439, %v441
      %v445 = vsel %vm333, %v441, %v443
      %448 = vst [vmem:[#allocation4 + $0x60] sm:$0xff] %v444
      %449 = vst [vmem:[#allocation4 + $0x68] sm:$0xff] %v445
      %v450 = vld [vmem:[#allocation2 + $0x8] sm:$0xff]
      %v451 = vld [vmem:[#allocation2 + $0x10] sm:$0xff]
      %v452 = vld [vmem:[#allocation2 + $0x18] sm:$0xff]
      %456 = vrot.lane.b32.xlu0 %v450, 112
      %v457 = vpop.permute.xlu0 %456
      %458 = vrot.lane.b32.xlu0 %v451, 112
      %v459 = vpop.permute.xlu0 %458
      %460 = vrot.lane.b32.xlu0 %v452, 112
      %v461 = vpop.permute.xlu0 %460
      %vm462 = vcmask 916480
      %v463 = vsel %vm462, %v457, %v459
      %v464 = vsel %vm462, %v459, %v461
      %467 = vst [vmem:[#allocation4 + $0x70] sm:$0xff] %v463
      %468 = vst [vmem:[#allocation4 + $0x78] sm:$0xff] %v464
      %v469 = vld [vmem:[#allocation2 + $0x8] sm:$0xff]
      %v470 = vld [vmem:[#allocation2 + $0x10] sm:$0xff]
      %v471 = vld [vmem:[#allocation2 + $0x18] sm:$0xff]
      %472 = vrot.lane.b32.xlu0 %v327, 17
      %v473 = vpop.permute.xlu0 %472
      %474 = vrot.lane.b32.xlu0 %v328, 17
      %v475 = vpop.permute.xlu0 %474
      %v476 = vsel %vm297, %v473, %v475
      %v480 = vmul.f32 %v469, %v473
      %v481 = vmul.f32 %v470, %v476
      %v482 = vmul.f32 %v471, %v475
      %486 = vrot.lane.b32.xlu0 %v480, 111
      %v487 = vpop.permute.xlu0 %486
      %488 = vrot.lane.b32.xlu0 %v481, 111
      %v489 = vpop.permute.xlu0 %488
      %490 = vrot.lane.b32.xlu0 %v482, 111
      %v491 = vpop.permute.xlu0 %490
      %v492 = vsel %vm280, %v487, %v489
      %v493 = vsel %vm280, %v489, %v491
      %496 = vst [vmem:[#allocation4 + $0x80] sm:$0xff] %v492
      %497 = vst [vmem:[#allocation4 + $0x88] sm:$0xff] %v493
      %v498 = vld [vmem:[%s2] sm:$0xff]
      %v499 = vld [vmem:[#allocation4] sm:$0xff]
      %v500 = vld [vmem:[#allocation4 + $0x8] sm:$0xff]
      %v501 = vld [vmem:[#allocation4 + $0x10] sm:$0xff]
      %v502 = vld [vmem:[#allocation4 + $0x18] sm:$0xff]
      %v503 = vld [vmem:[#allocation4 + $0x20] sm:$0xff]
      %v504 = vld [vmem:[#allocation4 + $0x28] sm:$0xff]
      %v505 = vld [vmem:[#allocation4 + $0x30] sm:$0xff]
      %v506 = vld [vmem:[#allocation4 + $0x38] sm:$0xff]
      %v507 = vld [vmem:[#allocation4 + $0x40] sm:$0xff]
      %v508 = vld [vmem:[#allocation4 + $0x48] sm:$0xff]
      %v509 = vld [vmem:[#allocation4 + $0x50] sm:$0xff]
      %v510 = vld [vmem:[#allocation4 + $0x58] sm:$0xff]
      %v511 = vld [vmem:[#allocation4 + $0x60] sm:$0xff]
      %v512 = vld [vmem:[#allocation4 + $0x68] sm:$0xff]
      %v513 = vld [vmem:[#allocation4 + $0x70] sm:$0xff]
      %v514 = vld [vmem:[#allocation4 + $0x78] sm:$0xff]
      %v515 = vld [vmem:[#allocation4 + $0x80] sm:$0xff]
      %v516 = vld [vmem:[#allocation4 + $0x88] sm:$0xff]
      %v517 = vld [vmem:[%s3] sm:$0xff]
      %519 = vset.pattern.permute.xlu0 0
      %520 = vperm.xlu0 %519, %v517
      %v521 = vpop.permute.xlu0 %520
      %vm523 = vcmask 588800
      %v525 = vsel %vm523, %v498, 0
      %527 = vmatpush.msra.mxu0 0.0
      %528 = vmatpush.msra.mxu0 0.0
      %529 = vmatpush.msra.mxu0 0.0
      %530 = vmatpush.msra.mxu0 0.0
      %531 = vmatpush.msra.mxu0 0.0
      %532 = vmatpush.msra.mxu0 0.0
      %533 = vmatpush.msra.mxu0 0.0
      %534 = vmatpush.msra.mxu0 %v515
      %535 = vmatpush.msra.mxu0 %v513
      %536 = vmatpush.msra.mxu0 %v511
      %537 = vmatpush.msra.mxu0 %v509
      %538 = vmatpush.msra.mxu0 %v507
      %539 = vmatpush.msra.mxu0 %v505
      %540 = vmatpush.msra.mxu0 %v503
      %541 = vmatpush.msra.mxu0 %v501
      %542 = vmatpush.msra.mxu0 %v499
      %543 = vmatmul.f32.gmra.mxu0 %v525
      %v544 = vpop.f32.mrf.mxu0
      %v545 = vadd.f32 %v521, %v544
      %546 = vdwg.mxu0
      %547 = vmatpush.msra.mxu0 0.0
      %548 = vmatpush.msra.mxu0 0.0
      %549 = vmatpush.msra.mxu0 0.0
      %550 = vmatpush.msra.mxu0 0.0
      %551 = vmatpush.msra.mxu0 0.0
      %552 = vmatpush.msra.mxu0 0.0
      %553 = vmatpush.msra.mxu0 0.0
      %554 = vmatpush.msra.mxu0 %v516
      %555 = vmatpush.msra.mxu0 %v514
      %556 = vmatpush.msra.mxu0 %v512
      %557 = vmatpush.msra.mxu0 %v510
      %558 = vmatpush.msra.mxu0 %v508
      %559 = vmatpush.msra.mxu0 %v506
      %560 = vmatpush.msra.mxu0 %v504
      %561 = vmatpush.msra.mxu0 %v502
      %562 = vmatpush.msra.mxu0 %v500
      %563 = vmatmul.f32.gmra.mxu0 %v525
      %v564 = vpop.f32.mrf.mxu0
      %v565 = vadd.f32 %v521, %v564
      %566 = vdwg.mxu0
      %v567 = vmax.f32 %v545, 0.0
      %v568 = vmax.f32 %v565, 0.0
      %569 = vst [vmem:[#allocation3 + $0x8] sm:$0xff] %v567
      %570 = vst [vmem:[#allocation3 + $0x10] sm:$0xff] %v568
      %v571 = vld [vmem:[#allocation3] sm:$0xff]
      %v572 = vld [vmem:[#allocation3 + $0x8] sm:$0xff]
      %v573 = vld [vmem:[#allocation3 + $0x10] sm:$0xff]
      %v574 = vmul.f32 %v571, %v277
      %v575 = vmul.f32 %v572, %v281
      %v576 = vmul.f32 %v573, %v279
      %580 = vrot.lane.b32.xlu0 %v574, 17
      %v581 = vpop.permute.xlu0 %580
      %582 = vrot.lane.b32.xlu0 %v575, 17
      %v583 = vpop.permute.xlu0 %582
      %584 = vrot.lane.b32.xlu0 %v576, 17
      %v585 = vpop.permute.xlu0 %584
      %v586 = vsel %vm297, %v581, %v583
      %v587 = vsel %vm297, %v583, %v585
      %590 = vst [vmem:[#allocation4] sm:$0xff] %v586
      %591 = vst [vmem:[#allocation4 + $0x8] sm:$0xff] %v587
      %v592 = vld [vmem:[#allocation3] sm:$0xff]
      %v593 = vld [vmem:[#allocation3 + $0x8] sm:$0xff]
      %v594 = vld [vmem:[#allocation3 + $0x10] sm:$0xff]
      %598 = vrot.lane.b32.xlu0 %v592, 16
      %v599 = vpop.permute.xlu0 %598
      %600 = vrot.lane.b32.xlu0 %v593, 16
      %v601 = vpop.permute.xlu0 %600
      %602 = vrot.lane.b32.xlu0 %v594, 16
      %v603 = vpop.permute.xlu0 %602
      %v604 = vsel %vm316, %v599, %v601
      %v605 = vsel %vm316, %v601, %v603
      %608 = vst [vmem:[#allocation4 + $0x10] sm:$0xff] %v604
      %609 = vst [vmem:[#allocation4 + $0x18] sm:$0xff] %v605
      %v610 = vld [vmem:[#allocation3] sm:$0xff]
      %v611 = vld [vmem:[#allocation3 + $0x8] sm:$0xff]
      %v612 = vld [vmem:[#allocation3 + $0x10] sm:$0xff]
      %v613 = vmul.f32 %v610, %v330
      %v614 = vmul.f32 %v611, %v334
      %v615 = vmul.f32 %v612, %v332
      %619 = vrot.lane.b32.xlu0 %v613, 15
      %v620 = vpop.permute.xlu0 %619
      %621 = vrot.lane.b32.xlu0 %v614, 15
      %v622 = vpop.permute.xlu0 %621
      %623 = vrot.lane.b32.xlu0 %v615, 15
      %v624 = vpop.permute.xlu0 %623
      %v625 = vsel %vm350, %v620, %v622
      %v626 = vsel %vm350, %v622, %v624
      %629 = vst [vmem:[#allocation4 + $0x20] sm:$0xff] %v625
      %630 = vst [vmem:[#allocation4 + $0x28] sm:$0xff] %v626
      %v631 = vld [vmem:[#allocation3] sm:$0xff]
      %v632 = vld [vmem:[#allocation3 + $0x8] sm:$0xff]
      %v633 = vld [vmem:[#allocation3 + $0x10] sm:$0xff]
      %v634 = vmul.f32 %v631, %v361
      %v635 = vmul.f32 %v632, %v365
      %v636 = vmul.f32 %v633, %v363
      %640 = vrot.lane.b32.xlu0 %v634, 1
      %v641 = vpop.permute.xlu0 %640
      %642 = vrot.lane.b32.xlu0 %v635, 1
      %v643 = vpop.permute.xlu0 %642
      %644 = vrot.lane.b32.xlu0 %v636, 1
      %v645 = vpop.permute.xlu0 %644
      %v646 = vsel %vm381, %v641, %v643
      %v647 = vsel %vm381, %v643, %v645
      %650 = vst [vmem:[#allocation4 + $0x30] sm:$0xff] %v646
      %651 = vst [vmem:[#allocation4 + $0x38] sm:$0xff] %v647
      %v652 = vld [vmem:[#allocation3 + $0x8] sm:$0xff]
      %v653 = vld [vmem:[#allocation3 + $0x10] sm:$0xff]
      %654 = vst [vmem:[#allocation4 + $0x40] sm:$0xff] %v652
      %655 = vst [vmem:[#allocation4 + $0x48] sm:$0xff] %v653
      %v656 = vld [vmem:[#allocation3 + $0x8] sm:$0xff]
      %v657 = vld [vmem:[#allocation3 + $0x10] sm:$0xff]
      %v658 = vld [vmem:[#allocation3 + $0x18] sm:$0xff]
      %v659 = vmul.f32 %v656, %v396
      %v660 = vmul.f32 %v657, %v399
      %v661 = vmul.f32 %v658, %v398
      %665 = vrot.lane.b32.xlu0 %v659, 127
      %v666 = vpop.permute.xlu0 %665
      %667 = vrot.lane.b32.xlu0 %v660, 127
      %v668 = vpop.permute.xlu0 %667
      %669 = vrot.lane.b32.xlu0 %v661, 127
      %v670 = vpop.permute.xlu0 %669
      %v671 = vsel %vm364, %v666, %v668
      %v672 = vsel %vm364, %v668, %v670
      %675 = vst [vmem:[#allocation4 + $0x50] sm:$0xff] %v671
      %676 = vst [vmem:[#allocation4 + $0x58] sm:$0xff] %v672
      %v677 = vld [vmem:[#allocation3 + $0x8] sm:$0xff]
      %v678 = vld [vmem:[#allocation3 + $0x10] sm:$0xff]
      %v679 = vld [vmem:[#allocation3 + $0x18] sm:$0xff]
      %v680 = vmul.f32 %v677, %v425
      %v681 = vmul.f32 %v678, %v428
      %v682 = vmul.f32 %v679, %v427
      %686 = vrot.lane.b32.xlu0 %v680, 113
      %v687 = vpop.permute.xlu0 %686
      %688 = vrot.lane.b32.xlu0 %v681, 113
      %v689 = vpop.permute.xlu0 %688
      %690 = vrot.lane.b32.xlu0 %v682, 113
      %v691 = vpop.permute.xlu0 %690
      %v692 = vsel %vm333, %v687, %v689
      %v693 = vsel %vm333, %v689, %v691
      %696 = vst [vmem:[#allocation4 + $0x60] sm:$0xff] %v692
      %697 = vst [vmem:[#allocation4 + $0x68] sm:$0xff] %v693
      %v698 = vld [vmem:[#allocation3 + $0x8] sm:$0xff]
      %v699 = vld [vmem:[#allocation3 + $0x10] sm:$0xff]
      %v700 = vld [vmem:[#allocation3 + $0x18] sm:$0xff]
      %704 = vrot.lane.b32.xlu0 %v698, 112
      %v705 = vpop.permute.xlu0 %704
      %706 = vrot.lane.b32.xlu0 %v699, 112
      %v707 = vpop.permute.xlu0 %706
      %708 = vrot.lane.b32.xlu0 %v700, 112
      %v709 = vpop.permute.xlu0 %708
      %v710 = vsel %vm462, %v705, %v707
      %v711 = vsel %vm462, %v707, %v709
      %714 = vst [vmem:[#allocation4 + $0x70] sm:$0xff] %v710
      %715 = vst [vmem:[#allocation4 + $0x78] sm:$0xff] %v711
      %v716 = vld [vmem:[#allocation3 + $0x8] sm:$0xff]
      %v717 = vld [vmem:[#allocation3 + $0x10] sm:$0xff]
      %v718 = vld [vmem:[#allocation3 + $0x18] sm:$0xff]
      %v719 = vmul.f32 %v716, %v473
      %v720 = vmul.f32 %v717, %v476
      %v721 = vmul.f32 %v718, %v475
      %725 = vrot.lane.b32.xlu0 %v719, 111
      %v726 = vpop.permute.xlu0 %725
      %727 = vrot.lane.b32.xlu0 %v720, 111
      %v728 = vpop.permute.xlu0 %727
      %729 = vrot.lane.b32.xlu0 %v721, 111
      %v730 = vpop.permute.xlu0 %729
      %v731 = vsel %vm280, %v726, %v728
      %v732 = vsel %vm280, %v728, %v730
      %735 = vst [vmem:[#allocation4 + $0x80] sm:$0xff] %v731
      %736 = vst [vmem:[#allocation4 + $0x88] sm:$0xff] %v732
      %v737 = vld [vmem:[%s4] sm:$0xff]
      %v738 = vld [vmem:[%s4 + $0x8] sm:$0xff]
      %v739 = vld [vmem:[%s4 + $0x10] sm:$0xff]
      %v740 = vld [vmem:[%s4 + $0x18] sm:$0xff]
      %v741 = vld [vmem:[#allocation4] sm:$0xff]
      %v742 = vld [vmem:[#allocation4 + $0x8] sm:$0xff]
      %v743 = vld [vmem:[#allocation4 + $0x10] sm:$0xff]
      %v744 = vld [vmem:[#allocation4 + $0x18] sm:$0xff]
      %v745 = vld [vmem:[#allocation4 + $0x20] sm:$0xff]
      %v746 = vld [vmem:[#allocation4 + $0x28] sm:$0xff]
      %v747 = vld [vmem:[#allocation4 + $0x30] sm:$0xff]
      %v748 = vld [vmem:[#allocation4 + $0x38] sm:$0xff]
      %v749 = vld [vmem:[#allocation4 + $0x40] sm:$0xff]
      %v750 = vld [vmem:[#allocation4 + $0x48] sm:$0xff]
      %v751 = vld [vmem:[#allocation4 + $0x50] sm:$0xff]
      %v752 = vld [vmem:[#allocation4 + $0x58] sm:$0xff]
      %v753 = vld [vmem:[#allocation4 + $0x60] sm:$0xff]
      %v754 = vld [vmem:[#allocation4 + $0x68] sm:$0xff]
      %v755 = vld [vmem:[#allocation4 + $0x70] sm:$0xff]
      %v756 = vld [vmem:[#allocation4 + $0x78] sm:$0xff]
      %v757 = vld [vmem:[#allocation4 + $0x80] sm:$0xff]
      %v758 = vld [vmem:[#allocation4 + $0x88] sm:$0xff]
      %v759 = vld [vmem:[%s5] sm:$0xff]
      %v760 = vld [vmem:[%s5 + $0x8] sm:$0xff]
      %v761 = vld [vmem:[%s5 + $0x10] sm:$0xff]
      %v762 = vld [vmem:[%s5 + $0x18] sm:$0xff]
      %764 = vset.pattern.permute.xlu0 0
      %765 = vperm.xlu0 %764, %v759
      %v766 = vpop.permute.xlu0 %765
      %769 = vset.pattern.permute.xlu0 0
      %770 = vperm.xlu0 %769, %v760
      %v771 = vpop.permute.xlu0 %770
      %774 = vset.pattern.permute.xlu0 0
      %775 = vperm.xlu0 %774, %v761
      %v776 = vpop.permute.xlu0 %775
      %779 = vset.pattern.permute.xlu0 0
      %780 = vperm.xlu0 %779, %v762
      %v781 = vpop.permute.xlu0 %780
      %v784 = vsel %vm523, %v737, 0
      %v787 = vsel %vm523, %v738, 0
      %v790 = vsel %vm523, %v739, 0
      %v793 = vsel %vm523, %v740, 0
      %795 = vmatpush.msra.mxu0 0.0
      %796 = vmatpush.msra.mxu0 0.0
      %797 = vmatpush.msra.mxu0 0.0
      %798 = vmatpush.msra.mxu0 0.0
      %799 = vmatpush.msra.mxu0 0.0
      %800 = vmatpush.msra.mxu0 0.0
      %801 = vmatpush.msra.mxu0 0.0
      %802 = vmatpush.msra.mxu0 %v757
      %803 = vmatpush.msra.mxu0 %v755
      %804 = vmatpush.msra.mxu0 %v753
      %805 = vmatpush.msra.mxu0 %v751
      %806 = vmatpush.msra.mxu0 %v749
      %807 = vmatpush.msra.mxu0 %v747
      %808 = vmatpush.msra.mxu0 %v745
      %809 = vmatpush.msra.mxu0 %v743
      %810 = vmatpush.msra.mxu0 %v741
      %811 = vmatmul.f32.gmra.mxu0 %v784
      %v812 = vpop.f32.mrf.mxu0
      %v813 = vadd.f32 %v766, %v812
      %814 = vmatmul.f32.gmra.mxu0 %v787
      %v815 = vpop.f32.mrf.mxu0
      %v816 = vadd.f32 %v771, %v815
      %817 = vmatmul.f32.gmra.mxu0 %v790
      %v818 = vpop.f32.mrf.mxu0
      %v819 = vadd.f32 %v776, %v818
      %820 = vmatmul.f32.gmra.mxu0 %v793
      %v821 = vpop.f32.mrf.mxu0
      %v822 = vadd.f32 %v781, %v821
      %823 = vdwg.mxu0
      %824 = vmatpush.msra.mxu0 0.0
      %825 = vmatpush.msra.mxu0 0.0
      %826 = vmatpush.msra.mxu0 0.0
      %827 = vmatpush.msra.mxu0 0.0
      %828 = vmatpush.msra.mxu0 0.0
      %829 = vmatpush.msra.mxu0 0.0
      %830 = vmatpush.msra.mxu0 0.0
      %831 = vmatpush.msra.mxu0 %v758
      %832 = vmatpush.msra.mxu0 %v756
      %833 = vmatpush.msra.mxu0 %v754
      %834 = vmatpush.msra.mxu0 %v752
      %835 = vmatpush.msra.mxu0 %v750
      %836 = vmatpush.msra.mxu0 %v748
      %837 = vmatpush.msra.mxu0 %v746
      %838 = vmatpush.msra.mxu0 %v744
      %839 = vmatpush.msra.mxu0 %v742
      %840 = vmatmul.f32.gmra.mxu0 %v784
      %v841 = vpop.f32.mrf.mxu0
      %v842 = vadd.f32 %v766, %v841
      %843 = vmatmul.f32.gmra.mxu0 %v787
      %v844 = vpop.f32.mrf.mxu0
      %v845 = vadd.f32 %v771, %v844
      %846 = vmatmul.f32.gmra.mxu0 %v790
      %v847 = vpop.f32.mrf.mxu0
      %v848 = vadd.f32 %v776, %v847
      %849 = vmatmul.f32.gmra.mxu0 %v793
      %v850 = vpop.f32.mrf.mxu0
      %v851 = vadd.f32 %v781, %v850
      %852 = vdwg.mxu0
      %v853 = vmax.f32 %v813, 0.0
      %v854 = vmax.f32 %v842, 0.0
      %v855 = vmax.f32 %v816, 0.0
      %v856 = vmax.f32 %v845, 0.0
      %v857 = vmax.f32 %v819, 0.0
      %v858 = vmax.f32 %v848, 0.0
      %v859 = vmax.f32 %v822, 0.0
      %v860 = vmax.f32 %v851, 0.0
      %861 = vst [vmem:[%s251] sm:$0xff] %v853
      %862 = vst [vmem:[%s251 + $0x8] sm:$0xff] %v854
      %s863 = scalar_lea.vmem %s251, 16
      %864 = vst [vmem:[%s863] sm:$0xff] %v855
      %865 = vst [vmem:[%s863 + $0x8] sm:$0xff] %v856
      %s866 = scalar_lea.vmem %s251, 32
      %867 = vst [vmem:[%s866] sm:$0xff] %v857
      %868 = vst [vmem:[%s866 + $0x8] sm:$0xff] %v858
      %s869 = scalar_lea.vmem %s251, 48
      %870 = vst [vmem:[%s869] sm:$0xff] %v859
      %871 = vst [vmem:[%s869 + $0x8] sm:$0xff] %v860
      %p872 = scmp.lt.s32.totalorder %s17, 1
      %s873 = scalar_select %p872, %s17, 1
      %s874 = smul.addr %s873, 8
      %s875 = smul.addr %s874, 8
      %s876 = scalar_lea.vmem %s6, %s875
      // Predicated region
      $region45: #{decoder_block_v2.1} parent=43 // pred_check
        %p877 = pneg %p166
      $region46: #{decoder_block_v2.1} parent=43 // pred_check_branch
        %879 = sbr.rel (%p877) target = $region48
      $region47: #{decoder_block_v2.1} parent=43 // pred_region
        _
      $region48: #{decoder_block_v2.1} parent=43 // pred_fallthru
        _
    $region44: #{decoder_block_v2.1} parent=5 // pred_fallthru
      _
    %p880 = scmp.le.s32.totalorder 2, %s12
    // Predicated region
    $region49: #{decoder_block_v2.1} parent=5 // pred_check
      %p881 = pneg %p880
    $region50: #{decoder_block_v2.1} parent=5 // pred_check_branch
      %883 = sbr.rel (%p881) target = $region52
    $region51: #{decoder_block_v2.1} parent=5 // pred_region
      %s884 = ssub.s32 %s12, 2
      // Predicated region
      $region53: #{decoder_block_v2.1} parent=51 // pred_check
        %p885 = pneg %p172
      $region54: #{decoder_block_v2.1} parent=51 // pred_check_branch
        %887 = sbr.rel (%p885) target = $region56
      $region55: #{decoder_block_v2.1} parent=51 // pred_region
        %p888 = scmp.lt.s32.totalorder %s18, 1
        %s889 = scalar_select %p888, %s18, 1
        %s890 = smul.addr %s889, 8
        %s891 = smul.addr %s890, 8
        %s892 = scalar_lea.vmem %s6, %s891
      $region56: #{decoder_block_v2.1} parent=51 // pred_fallthru
        _
    $region52: #{decoder_block_v2.1} parent=5 // pred_fallthru
      _
  $region6: #{decoder_block_v2.1} parent=0 // loop_footer
    %s16 = sadd.s32 1, %s12
  $region7: #{decoder_block_v2.1} parent=0 // loop_footer_branch
    %11 = sbr.rel target = $region3
  $region8: #{decoder_block_v2.1} parent=0 // loop_exit
    _

</llo_original>
